<compile_context>
chip_gen: v6e
topology: v6e:2x2x1
jax: 0.10.0
libtpu: 0.0.40
codegen_flags: <defaults>
</compile_context>

<pallas_src>
import functools

import jax
import jax.numpy as jnp
from jax.experimental import pallas as pl
from jax.experimental.pallas import tpu as pltpu

_LANES = 128
_SUBLANES = 8


def _round_up(x, m):
    return (x + m - 1) // m * m


def _mlp_kernel(x_ref, w1_ref, b1_ref, w2_ref, b2_ref, w3_ref, b3_ref, o_ref):
    # Cast x to the matmul operand dtype here (free VPU work under the MXU)
    # so the wrapper never does a separate HBM pass over x.
    x = x_ref[...].astype(w1_ref.dtype)

    # Layer 1: (tb, D_in) @ (D_in, 128) + (1, 128) -> tanh   (f32 accumulate)
    h1 = jnp.tanh(
        jnp.dot(x, w1_ref[...], preferred_element_type=jnp.float32) + b1_ref[...]
    )
    # Layer 2: (tb, 128) @ (128, 128) + (1, 128) -> tanh
    h2 = jnp.tanh(
        jnp.dot(h1.astype(w2_ref.dtype), w2_ref[...],
                preferred_element_type=jnp.float32)
        + b2_ref[...]
    )
    # Layer 3: (tb, 128) @ (128, D_out) + (1, D_out); lane-masked store is fine
    # on a mem-bound kernel -- only real bytes go back to HBM.
    o_ref[...] = (
        jnp.dot(h2.astype(w3_ref.dtype), w3_ref[...],
                preferred_element_type=jnp.float32)
        + b3_ref[...]
    ).astype(o_ref.dtype)


@functools.partial(jax.jit, static_argnames=("block_b", "use_bf16"))
def generator_forward(x, params, block_b=2048, use_bf16=True):
    """Generator MLP forward pass as a single Pallas kernel.

    x: (B, input_size) float32
    params: dict with w1 (D_in,96), b1 (1,96), w2 (96,128), b2 (1,128),
            w3 (128,D_out), b3 (1,D_out)  -- weights are (in, out), i.e.
            transposed vs. PyTorch nn.Linear.
    use_bf16: cast matmul operands (x tile + weights) to bf16 for MXU rate;
              accumulation, biases and tanh stay f32. False -> exact f32.
    """
    w1, b1 = params["w1"], params["b1"]
    w2, b2 = params["w2"], params["b2"]
    w3, b3 = params["w3"], params["b3"]

    B, d_in = x.shape
    d_h1 = w1.shape[1]          # 96
    d_h2 = w2.shape[1]          # 128
    d_out = w3.shape[1]

    # ---- pad only the *hidden* feature dim to a lane-dense multiple of 128 --
    # (weights are tiny; batch-sized tensors are never padded)
    d_h1_p = _round_up(d_h1, _LANES)     # 96 -> 128
    w1_p = jnp.pad(w1, ((0, 0), (0, d_h1_p - d_h1)))
    b1_p = jnp.pad(b1, ((0, 0), (0, d_h1_p - d_h1)))
    w2_p = jnp.pad(w2, ((0, d_h1_p - d_h1), (0, 0)))

    # ---- optional bf16 matmul operands (tiny wrapper-side weight casts) -----
    mm_dtype = jnp.bfloat16 if use_bf16 else x.dtype
    w1_p = w1_p.astype(mm_dtype)
    w2_p = w2_p.astype(mm_dtype)
    w3_p = w3.astype(mm_dtype)

    # ---- choose batch tile (multiple of 8; big enough to feed the MXU) ------
    bb = max(_SUBLANES, min(int(block_b), _round_up(B, _SUBLANES)))
    bb = _round_up(bb, _SUBLANES)
    # v7x has 2 TensorCores: aim for >= 4 grid steps when the batch is large
    # enough so each core gets pipelined work. Extra steps cost ~0.35us each
    # on single-core chips -- negligible.
    if pl.cdiv(B, bb) < 4 and B >= 4 * 2 * _LANES:
        bb = _round_up(pl.cdiv(B, 4), _SUBLANES)

    grid = (pl.cdiv(B, bb),)   # ragged last block handled by Pallas

    # Weights/biases are small and grid-invariant: full-array blocks, index_map
    # ignores the grid index so Pallas keeps them resident in VMEM.
    full = lambda shape: pl.BlockSpec(shape, lambda i: (0, 0))

    mm_itemsize = jnp.dtype(mm_dtype).itemsize
    w_bytes = (d_in * d_h1_p + d_h1_p * d_h2 + d_h2 * d_out) * mm_itemsize
    cost = pl.CostEstimate(
        flops=2 * B * (d_in * d_h1_p + d_h1_p * d_h2 + d_h2 * d_out),
        transcendentals=B * (d_h1_p + d_h2),
        bytes_accessed=(
            B * d_in * jnp.dtype(x.dtype).itemsize   # x (read once, f32)
            + w_bytes                                # weights (mm dtype)
            + (d_h1_p + d_h2 + d_out) * 4            # biases (f32)
            + B * d_out * 4                          # un-padded f32 output
        ),
    )

    # TODO(synk): if the consumer tolerates bf16, emit a bf16 out_shape to
    # halve output HBM writeback (and bf16 tanh on v6e/v7x).
    out = pl.pallas_call(
        _mlp_kernel,
        out_shape=jax.ShapeDtypeStruct((B, d_out), jnp.float32),
        grid_spec=pltpu.PrefetchScalarGridSpec(
            num_scalar_prefetch=0,
            grid=grid,
            in_specs=[
                pl.BlockSpec((bb, d_in), lambda i: (i, 0)),   # x batch tile
                full((d_in, d_h1_p)), full((1, d_h1_p)),
                full((d_h1_p, d_h2)), full((1, d_h2)),
                full((d_h2, d_out)), full((1, d_out)),
            ],
            out_specs=pl.BlockSpec((bb, d_out), lambda i: (i, 0)),
        ),
        compiler_params=pltpu.CompilerParams(
            dimension_semantics=("parallel",),
        ),
        cost_estimate=cost,
    )(x, w1_p, b1_p, w2_p, b2, w3_p, b3)

    return out


def init_generator_params(key, input_size, output_size):
    """Init mimicking torch.nn.Linear default (U[-1/sqrt(in), 1/sqrt(in)]).

    Weights are stored as (in_features, out_features) — transposed vs. PyTorch.
    """
    dims = [(input_size, 96), (96, 128), (128, output_size)]
    params = {}
    for idx, (fan_in, fan_out) in enumerate(dims, start=1):
        key, kw, kb = jax.random.split(key, 3)
        bound = 1.0 / jnp.sqrt(jnp.float32(fan_in))
        params[f"w{idx}"] = jax.random.uniform(
            kw, (fan_in, fan_out), jnp.float32, -bound, bound
        )
        params[f"b{idx}"] = jax.random.uniform(
            kb, (1, fan_out), jnp.float32, -bound, bound
        )
    return params


def _reference_forward(x, params):
    h1 = jnp.tanh(x @ params["w1"] + params["b1"])
    h2 = jnp.tanh(h1 @ params["w2"] + params["b2"])
    return h2 @ params["w3"] + params["b3"]


if __name__ == "__main__":
    key = jax.random.PRNGKey(0)
    key_x, key_x2, key_p = jax.random.split(key, 3)

    input_size = 32
    output_size = 16
    params = init_generator_params(key_p, input_size, output_size)

    # Small, exact-f32 check (single grid step).
    batch = 8
    x = jax.random.normal(key_x, (batch, input_size), jnp.float32)
    out = jax.block_until_ready(generator_forward(x, params, use_bf16=False))
    ref = _reference_forward(x, params)
    assert out.shape == (batch, output_size)
    assert jnp.allclose(out, ref, atol=1e-5, rtol=1e-5), "mismatch vs reference (f32)"

    # Multi-step grid with a ragged last tile (200 = 128 + 72), exact f32.
    batch2 = 200
    x2 = jax.random.normal(key_x2, (batch2, input_size), jnp.float32)
    out2 = jax.block_until_ready(
        generator_forward(x2, params, block_b=128, use_bf16=False)
    )
    ref2 = _reference_forward(x2, params)
    assert out2.shape == (batch2, output_size)
    assert jnp.allclose(out2, ref2, atol=1e-5, rtol=1e-5), "mismatch vs reference (tiled)"

    # Default bf16 MXU-operand path (v5e/v6e/v7x perf option), loose tolerance.
    out_bf16 = jax.block_until_ready(generator_forward(x2, params, block_b=128))
    assert out_bf16.shape == (batch2, output_size)
    assert jnp.allclose(out_bf16, ref2, atol=5e-2, rtol=5e-2), "mismatch vs reference (bf16)"

    print("KERNEL_OK")
</pallas_src>

<mosaic_0001>
module attributes {stable_mosaic.version = 11 : i64} {
  func.func @_mlp_kernel(%arg0: i32, %arg1: memref<8x32xf32, #tpu.memory_space<vmem>>, %arg2: memref<32x128xf32, #tpu.memory_space<vmem>>, %arg3: memref<1x128xf32, #tpu.memory_space<vmem>>, %arg4: memref<128x128xf32, #tpu.memory_space<vmem>>, %arg5: memref<1x128xf32, #tpu.memory_space<vmem>>, %arg6: memref<128x16xf32, #tpu.memory_space<vmem>>, %arg7: memref<1x16xf32, #tpu.memory_space<vmem>>, %arg8: memref<8x16xf32, #tpu.memory_space<vmem>>) attributes {dimension_semantics = [#tpu.dimension_semantics<parallel>], iteration_bounds = array<i64: 1>, scalar_prefetch = 0 : i64, scratch_operands = 0 : i64, tpu.core_type = #tpu.core_type<tc>, window_params = [{transform_indices = @transform_0, window_bounds = array<i64: 8, 32>}, {pipeline_mode = #tpu.pipeline_mode<synchronous>, transform_indices = @transform_1, window_bounds = array<i64: 32, 128>}, {pipeline_mode = #tpu.pipeline_mode<synchronous>, transform_indices = @transform_2, window_bounds = array<i64: 1, 128>}, {pipeline_mode = #tpu.pipeline_mode<synchronous>, transform_indices = @transform_3, window_bounds = array<i64: 128, 128>}, {pipeline_mode = #tpu.pipeline_mode<synchronous>, transform_indices = @transform_4, window_bounds = array<i64: 1, 128>}, {pipeline_mode = #tpu.pipeline_mode<synchronous>, transform_indices = @transform_5, window_bounds = array<i64: 128, 16>}, {pipeline_mode = #tpu.pipeline_mode<synchronous>, transform_indices = @transform_6, window_bounds = array<i64: 1, 16>}, {transform_indices = @transform_7, window_bounds = array<i64: 8, 16>}]} {
    %c0 = arith.constant 0 : index
    %c0_0 = arith.constant 0 : index
    %0 = vector.load %arg1[%c0, %c0_0] : memref<8x32xf32, #tpu.memory_space<vmem>>, vector<8x32xf32>
    %c0_1 = arith.constant 0 : index
    %c0_2 = arith.constant 0 : index
    %1 = vector.load %arg2[%c0_1, %c0_2] : memref<32x128xf32, #tpu.memory_space<vmem>>, vector<32x128xf32>
    %cst = arith.constant dense<0.000000e+00> : vector<8x128xf32>
    %2 = tpu.matmul %0, %1, %cst {dimension_numbers = #tpu.dot_dimension_numbers<[1], [0], [0], [1], [0, 0, 1, 1], [], []>} : vector<8x32xf32>, vector<32x128xf32>, vector<8x128xf32> -> vector<8x128xf32>
    %c0_3 = arith.constant 0 : index
    %c0_4 = arith.constant 0 : index
    %3 = vector.load %arg3[%c0_3, %c0_4] : memref<1x128xf32, #tpu.memory_space<vmem>>, vector<1x128xf32>
    %4 = vector.broadcast %3 : vector<1x128xf32> to vector<8x128xf32>
    %5 = arith.addf %2, %4 : vector<8x128xf32>
    %6 = math.tanh %5 : vector<8x128xf32>
    %c0_5 = arith.constant 0 : index
    %c0_6 = arith.constant 0 : index
    %7 = vector.load %arg4[%c0_5, %c0_6] : memref<128x128xf32, #tpu.memory_space<vmem>>, vector<128x128xf32>
    %cst_7 = arith.constant dense<0.000000e+00> : vector<8x128xf32>
    %8 = tpu.matmul %6, %7, %cst_7 {dimension_numbers = #tpu.dot_dimension_numbers<[1], [0], [0], [1], [0, 0, 1, 1], [], []>} : vector<8x128xf32>, vector<128x128xf32>, vector<8x128xf32> -> vector<8x128xf32>
    %c0_8 = arith.constant 0 : index
    %c0_9 = arith.constant 0 : index
    %9 = vector.load %arg5[%c0_8, %c0_9] : memref<1x128xf32, #tpu.memory_space<vmem>>, vector<1x128xf32>
    %10 = vector.broadcast %9 : vector<1x128xf32> to vector<8x128xf32>
    %11 = arith.addf %8, %10 : vector<8x128xf32>
    %12 = math.tanh %11 : vector<8x128xf32>
    %c0_10 = arith.constant 0 : index
    %c0_11 = arith.constant 0 : index
    %13 = vector.load %arg6[%c0_10, %c0_11] : memref<128x16xf32, #tpu.memory_space<vmem>>, vector<128x16xf32>
    %cst_12 = arith.constant dense<0.000000e+00> : vector<8x16xf32>
    %14 = tpu.matmul %12, %13, %cst_12 {dimension_numbers = #tpu.dot_dimension_numbers<[1], [0], [0], [1], [0, 0, 1, 1], [], []>} : vector<8x128xf32>, vector<128x16xf32>, vector<8x16xf32> -> vector<8x16xf32>
    %c0_13 = arith.constant 0 : index
    %c0_14 = arith.constant 0 : index
    %15 = vector.load %arg7[%c0_13, %c0_14] : memref<1x16xf32, #tpu.memory_space<vmem>>, vector<1x16xf32>
    %16 = vector.broadcast %15 : vector<1x16xf32> to vector<8x16xf32>
    %17 = arith.addf %14, %16 : vector<8x16xf32>
    %c0_15 = arith.constant 0 : index
    %c0_16 = arith.constant 0 : index
    %18 = vector.load %arg8[%c0_15, %c0_16] : memref<8x16xf32, #tpu.memory_space<vmem>>, vector<8x16xf32>
    tpu.vector_store %arg8[%c0_15, %c0_16], %17 {strides = array<i32>} : memref<8x16xf32, #tpu.memory_space<vmem>>, vector<8x16xf32>,
    return
  }
  func.func @transform_0(%arg0: i32) -> (i32, i32) {
    %c0_i32 = arith.constant 0 : i32
    %c0_i32_0 = arith.constant 0 : i32
    return %arg0, %c0_i32 : i32, i32
  }
  func.func @transform_1(%arg0: i32) -> (i32, i32) {
    %c0_i32 = arith.constant 0 : i32
    %c0_i32_0 = arith.constant 0 : i32
    %c0_i32_1 = arith.constant 0 : i32
    return %c0_i32, %c0_i32_0 : i32, i32
  }
  func.func @transform_2(%arg0: i32) -> (i32, i32) {
    %c0_i32 = arith.constant 0 : i32
    %c0_i32_0 = arith.constant 0 : i32
    %c0_i32_1 = arith.constant 0 : i32
    return %c0_i32, %c0_i32_0 : i32, i32
  }
  func.func @transform_3(%arg0: i32) -> (i32, i32) {
    %c0_i32 = arith.constant 0 : i32
    %c0_i32_0 = arith.constant 0 : i32
    %c0_i32_1 = arith.constant 0 : i32
    return %c0_i32, %c0_i32_0 : i32, i32
  }
  func.func @transform_4(%arg0: i32) -> (i32, i32) {
    %c0_i32 = arith.constant 0 : i32
    %c0_i32_0 = arith.constant 0 : i32
    %c0_i32_1 = arith.constant 0 : i32
    return %c0_i32, %c0_i32_0 : i32, i32
  }
  func.func @transform_5(%arg0: i32) -> (i32, i32) {
    %c0_i32 = arith.constant 0 : i32
    %c0_i32_0 = arith.constant 0 : i32
    %c0_i32_1 = arith.constant 0 : i32
    return %c0_i32, %c0_i32_0 : i32, i32
  }
  func.func @transform_6(%arg0: i32) -> (i32, i32) {
    %c0_i32 = arith.constant 0 : i32
    %c0_i32_0 = arith.constant 0 : i32
    %c0_i32_1 = arith.constant 0 : i32
    return %c0_i32, %c0_i32_0 : i32, i32
  }
  func.func @transform_7(%arg0: i32) -> (i32, i32) {
    %c0_i32 = arith.constant 0 : i32
    %c0_i32_0 = arith.constant 0 : i32
    return %arg0, %c0_i32 : i32, i32
  }
}

</mosaic_0001>

<llo_original>
// kernel: generator_forward.1
$region0: #{generator_forward.1}
  #allocation0 [shape = 'u32[]', space=smem, size = 0x4, offset = 0x4, fixed_abs, tag = 'smem constant byte address 0x4 - core index']
  #allocation1 [shape = 'u32[144,128]{1,0:T(1,128)}', space=vmem, size = 0x12000, scoped, tag = 'internal scratch']
  %s0 = inlined_call_operand.vmem [shape: f32[8,32], index: 0, kind: input, shape index: {}]
  %s1 = inlined_call_operand.vmem [shape: f32[32,128], index: 1, kind: input, shape index: {}]
  %s2 = inlined_call_operand.vmem [shape: f32[1,128], index: 2, kind: input, shape index: {}]
  %s3 = inlined_call_operand.vmem [shape: f32[128,128], index: 3, kind: input, shape index: {}]
  %s4 = inlined_call_operand.vmem [shape: f32[1,128], index: 4, kind: input, shape index: {}]
  %s5 = inlined_call_operand.vmem [shape: f32[128,16], index: 5, kind: input, shape index: {}]
  %s6 = inlined_call_operand.vmem [shape: f32[1,16], index: 6, kind: input, shape index: {}]
  %s7 = inlined_call_operand.hbm [shape: f32[8,16], index: 7, kind: output, shape index: {}]
  %s8 = sld [smem:[#allocation0]]
  $region38: #{generator_forward.1} parent=0
    _
  %s10 = ssub.s32 1, %s8
  %s11 = scalar_select 0, %s10, %s8
  $region1: #{generator_forward.1} parent=0
    #allocation2 [shape = 'u8[4096]{0}', space=vmem, size = 0x1000, scoped, tag = 'output window, operand 0, single buffered']
    #allocation3 [shape = 's32[1]{0}', space=sflag, size = 0x4, scoped, tag = 'scoped memory for generator_forward.1']
    %12 = vsyncpa [#allocation3], 0
    // Predicated region
    $region2: #{generator_forward.1} parent=1 // pred_check
      _
    $region3: #{generator_forward.1} parent=1 // pred_check_branch
      %14 = sbr.rel (0) target = $region5
    $region4: #{generator_forward.1} parent=1 // pred_region
      _
    $region5: #{generator_forward.1} parent=1 // pred_fallthru
      _
    // Predicated region
    $region6: #{generator_forward.1} parent=1 // pred_check
      _
    $region7: #{generator_forward.1} parent=1 // pred_check_branch
      %16 = sbr.rel (0) target = $region9
    $region8: #{generator_forward.1} parent=1 // pred_region
      _
    $region9: #{generator_forward.1} parent=1 // pred_fallthru
      _
    // Predicated region
    $region10: #{generator_forward.1} parent=1 // pred_check
      _
    $region11: #{generator_forward.1} parent=1 // pred_check_branch
      %18 = sbr.rel (0) target = $region13
    $region12: #{generator_forward.1} parent=1 // pred_region
      _
    $region13: #{generator_forward.1} parent=1 // pred_fallthru
      _
    // Predicated region
    $region14: #{generator_forward.1} parent=1 // pred_check
      _
    $region15: #{generator_forward.1} parent=1 // pred_check_branch
      %20 = sbr.rel (0) target = $region17
    $region16: #{generator_forward.1} parent=1 // pred_region
      _
    $region17: #{generator_forward.1} parent=1 // pred_fallthru
      _
    // Predicated region
    $region18: #{generator_forward.1} parent=1 // pred_check
      _
    $region19: #{generator_forward.1} parent=1 // pred_check_branch
      %22 = sbr.rel (0) target = $region21
    $region20: #{generator_forward.1} parent=1 // pred_region
      _
    $region21: #{generator_forward.1} parent=1 // pred_fallthru
      _
    // Predicated region
    $region22: #{generator_forward.1} parent=1 // pred_check
      _
    $region23: #{generator_forward.1} parent=1 // pred_check_branch
      %24 = sbr.rel (0) target = $region25
    $region24: #{generator_forward.1} parent=1 // pred_region
      _
    $region25: #{generator_forward.1} parent=1 // pred_fallthru
      _
    // Predicated region
    $region26: #{generator_forward.1} parent=1 // pred_check
      _
    $region27: #{generator_forward.1} parent=1 // pred_check_branch
      %26 = sbr.rel (0) target = $region29
    $region28: #{generator_forward.1} parent=1 // pred_region
      _
    $region29: #{generator_forward.1} parent=1 // pred_fallthru
      _
    %v27 = vld [vmem:[%s0] sm:$0xff]
    %v28 = vld [vmem:[%s1] sm:$0xff]
    %v29 = vld [vmem:[%s1 + $0x8] sm:$0xff]
    %v30 = vld [vmem:[%s1 + $0x10] sm:$0xff]
    %v31 = vld [vmem:[%s1 + $0x18] sm:$0xff]
    %v32 = vld [vmem:[%s2] sm:$0x1]
    %v34 = vlaneseq
    %v35 = vshrl.u32 %v34, 7
    %v36 = vsub.s32 0, %v35
    %v37 = vrot.slane %v32, %v36
    %vm39 = vcmask 261120
    %v41 = vsel %vm39, %v27, 0
    %43 = vmatprep.subr.mxu0 0.0
    %44 = vmatpush1.msra.mxu0 0.0
    %45 = vmatprep.subr.mxu0 0.0
    %46 = vmatpush1.msra.mxu0 0.0
    %47 = vmatprep.subr.mxu0 0.0
    %48 = vmatpush1.msra.mxu0 0.0
    %49 = vmatprep.subr.mxu0 0.0
    %50 = vmatpush1.msra.mxu0 0.0
    %51 = vmatprep.subr.mxu0 0.0
    %52 = vmatpush1.msra.mxu0 0.0
    %53 = vmatprep.subr.mxu0 0.0
    %54 = vmatpush1.msra.mxu0 0.0
    %55 = vmatprep.subr.mxu0 0.0
    %56 = vmatpush1.msra.mxu0 0.0
    %57 = vmatprep.subr.mxu0 0.0
    %58 = vmatpush1.msra.mxu0 0.0
    %59 = vmatprep.subr.mxu0 0.0
    %60 = vmatpush1.msra.mxu0 0.0
    %61 = vmatprep.subr.mxu0 0.0
    %62 = vmatpush1.msra.mxu0 0.0
    %63 = vmatprep.subr.mxu0 0.0
    %64 = vmatpush1.msra.mxu0 0.0
    %65 = vmatprep.subr.mxu0 0.0
    %66 = vmatpush1.msra.mxu0 0.0
    %67 = vmatprep.subr.mxu0 0.0
    %68 = vmatpush1.msra.mxu0 %v31
    %69 = vmatprep.subr.mxu0 0.0
    %70 = vmatpush1.msra.mxu0 %v30
    %71 = vmatprep.subr.mxu0 0.0
    %72 = vmatpush1.msra.mxu0 %v29
    %73 = vmatprep.subr.mxu0 0.0
    %74 = vmatpush1.msra.mxu0 %v28
    %75 = vmatprep.subr.mxu0 0.0
    %76 = vmatpush2.msra.mxu0 0.0
    %77 = vmatprep.subr.mxu0 0.0
    %78 = vmatpush2.msra.mxu0 0.0
    %79 = vmatprep.subr.mxu0 0.0
    %80 = vmatpush2.msra.mxu0 0.0
    %81 = vmatprep.subr.mxu0 0.0
    %82 = vmatpush2.msra.mxu0 0.0
    %83 = vmatprep.subr.mxu0 0.0
    %84 = vmatpush2.msra.mxu0 0.0
    %85 = vmatprep.subr.mxu0 0.0
    %86 = vmatpush2.msra.mxu0 0.0
    %87 = vmatprep.subr.mxu0 0.0
    %88 = vmatpush2.msra.mxu0 0.0
    %89 = vmatprep.subr.mxu0 0.0
    %90 = vmatpush2.msra.mxu0 0.0
    %91 = vmatprep.subr.mxu0 0.0
    %92 = vmatpush2.msra.mxu0 0.0
    %93 = vmatprep.subr.mxu0 0.0
    %94 = vmatpush2.msra.mxu0 0.0
    %95 = vmatprep.subr.mxu0 0.0
    %96 = vmatpush2.msra.mxu0 0.0
    %97 = vmatprep.subr.mxu0 0.0
    %98 = vmatpush2.msra.mxu0 0.0
    %99 = vmatprep.subr.mxu0 0.0
    %100 = vmatpush2.msra.mxu0 0.0
    %101 = vmatprep.subr.mxu0 0.0
    %102 = vmatpush2.msra.mxu0 0.0
    %103 = vmatprep.subr.mxu0 0.0
    %104 = vmatpush2.msra.mxu0 0.0
    %105 = vmatprep.subr.mxu0 0.0
    %106 = vmatpush2.msra.mxu0 0.0
    %107 = vmatprep.mubr.f32.mxu0 0.0
    %108 = vmatmul.mubr.f32.gmra.mxu0 %v41
    %v109 = vpop.f32.mrf.mxu0
    %v110 = vadd.f32 %v37, %v109
    %v111 = vpop.f32.mrf.mxu0
    %112 = vdwg.mxu0
    %v113 = vtanh.pop %v110
    %v114 = vld [vmem:[%s3] sm:$0xff]
    %v115 = vld [vmem:[%s3 + $0x8] sm:$0xff]
    %v116 = vld [vmem:[%s3 + $0x10] sm:$0xff]
    %v117 = vld [vmem:[%s3 + $0x18] sm:$0xff]
    %v118 = vld [vmem:[%s3 + $0x20] sm:$0xff]
    %v119 = vld [vmem:[%s3 + $0x28] sm:$0xff]
    %v120 = vld [vmem:[%s3 + $0x30] sm:$0xff]
    %v121 = vld [vmem:[%s3 + $0x38] sm:$0xff]
    %v122 = vld [vmem:[%s3 + $0x40] sm:$0xff]
    %v123 = vld [vmem:[%s3 + $0x48] sm:$0xff]
    %v124 = vld [vmem:[%s3 + $0x50] sm:$0xff]
    %v125 = vld [vmem:[%s3 + $0x58] sm:$0xff]
    %v126 = vld [vmem:[%s3 + $0x60] sm:$0xff]
    %v127 = vld [vmem:[%s3 + $0x68] sm:$0xff]
    %v128 = vld [vmem:[%s3 + $0x70] sm:$0xff]
    %v129 = vld [vmem:[%s3 + $0x78] sm:$0xff]
    %v130 = vld [vmem:[%s4] sm:$0x1]
    %v132 = vlaneseq
    %v133 = vshrl.u32 %v132, 7
    %v134 = vsub.s32 0, %v133
    %v135 = vrot.slane %v130, %v134
    %137 = vmatprep.subr.mxu0 0.0
    %138 = vmatpush1.msra.mxu0 %v129
    %139 = vmatprep.subr.mxu0 0.0
    %140 = vmatpush1.msra.mxu0 %v128
    %141 = vmatprep.subr.mxu0 0.0
    %142 = vmatpush1.msra.mxu0 %v127
    %143 = vmatprep.subr.mxu0 0.0
    %144 = vmatpush1.msra.mxu0 %v126
    %145 = vmatprep.subr.mxu0 0.0
    %146 = vmatpush1.msra.mxu0 %v125
    %147 = vmatprep.subr.mxu0 0.0
    %148 = vmatpush1.msra.mxu0 %v124
    %149 = vmatprep.subr.mxu0 0.0
    %150 = vmatpush1.msra.mxu0 %v123
    %151 = vmatprep.subr.mxu0 0.0
    %152 = vmatpush1.msra.mxu0 %v122
    %153 = vmatprep.subr.mxu0 0.0
    %154 = vmatpush1.msra.mxu0 %v121
    %155 = vmatprep.subr.mxu0 0.0
    %156 = vmatpush1.msra.mxu0 %v120
    %157 = vmatprep.subr.mxu0 0.0
    %158 = vmatpush1.msra.mxu0 %v119
    %159 = vmatprep.subr.mxu0 0.0
    %160 = vmatpush1.msra.mxu0 %v118
    %161 = vmatprep.subr.mxu0 0.0
    %162 = vmatpush1.msra.mxu0 %v117
    %163 = vmatprep.subr.mxu0 0.0
    %164 = vmatpush1.msra.mxu0 %v116
    %165 = vmatprep.subr.mxu0 0.0
    %166 = vmatpush1.msra.mxu0 %v115
    %167 = vmatprep.subr.mxu0 0.0
    %168 = vmatpush1.msra.mxu0 %v114
    %169 = vmatprep.subr.mxu0 0.0
    %170 = vmatpush2.msra.mxu0 0.0
    %171 = vmatprep.subr.mxu0 0.0
    %172 = vmatpush2.msra.mxu0 0.0
    %173 = vmatprep.subr.mxu0 0.0
    %174 = vmatpush2.msra.mxu0 0.0
    %175 = vmatprep.subr.mxu0 0.0
    %176 = vmatpush2.msra.mxu0 0.0
    %177 = vmatprep.subr.mxu0 0.0
    %178 = vmatpush2.msra.mxu0 0.0
    %179 = vmatprep.subr.mxu0 0.0
    %180 = vmatpush2.msra.mxu0 0.0
    %181 = vmatprep.subr.mxu0 0.0
    %182 = vmatpush2.msra.mxu0 0.0
    %183 = vmatprep.subr.mxu0 0.0
    %184 = vmatpush2.msra.mxu0 0.0
    %185 = vmatprep.subr.mxu0 0.0
    %186 = vmatpush2.msra.mxu0 0.0
    %187 = vmatprep.subr.mxu0 0.0
    %188 = vmatpush2.msra.mxu0 0.0
    %189 = vmatprep.subr.mxu0 0.0
    %190 = vmatpush2.msra.mxu0 0.0
    %191 = vmatprep.subr.mxu0 0.0
    %192 = vmatpush2.msra.mxu0 0.0
    %193 = vmatprep.subr.mxu0 0.0
    %194 = vmatpush2.msra.mxu0 0.0
    %195 = vmatprep.subr.mxu0 0.0
    %196 = vmatpush2.msra.mxu0 0.0
    %197 = vmatprep.subr.mxu0 0.0
    %198 = vmatpush2.msra.mxu0 0.0
    %199 = vmatprep.subr.mxu0 0.0
    %200 = vmatpush2.msra.mxu0 0.0
    %201 = vmatprep.mubr.f32.mxu0 0.0
    %202 = vmatmul.mubr.f32.gmra.mxu0 %v113
    %v203 = vpop.f32.mrf.mxu0
    %v204 = vadd.f32 %v135, %v203
    %v205 = vpop.f32.mrf.mxu0
    %206 = vdwg.mxu0
    %v207 = vtanh.pop %v204
    %v208 = vld [vmem:[%s5] sm:$0xff]
    %v209 = vld [vmem:[%s5 + $0x8] sm:$0xff]
    %v210 = vld [vmem:[%s5 + $0x10] sm:$0xff]
    %v211 = vld [vmem:[%s5 + $0x18] sm:$0xff]
    %v212 = vld [vmem:[%s5 + $0x20] sm:$0xff]
    %v213 = vld [vmem:[%s5 + $0x28] sm:$0xff]
    %v214 = vld [vmem:[%s5 + $0x30] sm:$0xff]
    %v215 = vld [vmem:[%s5 + $0x38] sm:$0xff]
    %v216 = vld [vmem:[%s5 + $0x40] sm:$0xff]
    %v217 = vld [vmem:[%s5 + $0x48] sm:$0xff]
    %v218 = vld [vmem:[%s5 + $0x50] sm:$0xff]
    %v219 = vld [vmem:[%s5 + $0x58] sm:$0xff]
    %v220 = vld [vmem:[%s5 + $0x60] sm:$0xff]
    %v221 = vld [vmem:[%s5 + $0x68] sm:$0xff]
    %v222 = vld [vmem:[%s5 + $0x70] sm:$0xff]
    %v223 = vld [vmem:[%s5 + $0x78] sm:$0xff]
    %v224 = vld [vmem:[%s6] sm:$0x1]
    %v226 = vlaneseq
    %v227 = vshrl.u32 %v226, 7
    %v228 = vsub.s32 0, %v227
    %v229 = vrot.slane %v224, %v228
    %231 = vmatprep.subr.mxu0 0.0
    %232 = vmatpush1.msra.mxu0 %v223
    %233 = vmatprep.subr.mxu0 0.0
    %234 = vmatpush1.msra.mxu0 %v222
    %235 = vmatprep.subr.mxu0 0.0
    %236 = vmatpush1.msra.mxu0 %v221
    %237 = vmatprep.subr.mxu0 0.0
    %238 = vmatpush1.msra.mxu0 %v220
    %239 = vmatprep.subr.mxu0 0.0
    %240 = vmatpush1.msra.mxu0 %v219
    %241 = vmatprep.subr.mxu0 0.0
    %242 = vmatpush1.msra.mxu0 %v218
    %243 = vmatprep.subr.mxu0 0.0
    %244 = vmatpush1.msra.mxu0 %v217
    %245 = vmatprep.subr.mxu0 0.0
    %246 = vmatpush1.msra.mxu0 %v216
    %247 = vmatprep.subr.mxu0 0.0
    %248 = vmatpush1.msra.mxu0 %v215
    %249 = vmatprep.subr.mxu0 0.0
    %250 = vmatpush1.msra.mxu0 %v214
    %251 = vmatprep.subr.mxu0 0.0
    %252 = vmatpush1.msra.mxu0 %v213
    %253 = vmatprep.subr.mxu0 0.0
    %254 = vmatpush1.msra.mxu0 %v212
    %255 = vmatprep.subr.mxu0 0.0
    %256 = vmatpush1.msra.mxu0 %v211
    %257 = vmatprep.subr.mxu0 0.0
    %258 = vmatpush1.msra.mxu0 %v210
    %259 = vmatprep.subr.mxu0 0.0
    %260 = vmatpush1.msra.mxu0 %v209
    %261 = vmatprep.subr.mxu0 0.0
    %262 = vmatpush1.msra.mxu0 %v208
    %263 = vmatprep.subr.mxu0 0.0
    %264 = vmatpush2.msra.mxu0 0.0
    %265 = vmatprep.subr.mxu0 0.0
    %266 = vmatpush2.msra.mxu0 0.0
    %267 = vmatprep.subr.mxu0 0.0
    %268 = vmatpush2.msra.mxu0 0.0
    %269 = vmatprep.subr.mxu0 0.0
    %270 = vmatpush2.msra.mxu0 0.0
    %271 = vmatprep.subr.mxu0 0.0
    %272 = vmatpush2.msra.mxu0 0.0
    %273 = vmatprep.subr.mxu0 0.0
    %274 = vmatpush2.msra.mxu0 0.0
    %275 = vmatprep.subr.mxu0 0.0
    %276 = vmatpush2.msra.mxu0 0.0
    %277 = vmatprep.subr.mxu0 0.0
    %278 = vmatpush2.msra.mxu0 0.0
    %279 = vmatprep.subr.mxu0 0.0
    %280 = vmatpush2.msra.mxu0 0.0
    %281 = vmatprep.subr.mxu0 0.0
    %282 = vmatpush2.msra.mxu0 0.0
    %283 = vmatprep.subr.mxu0 0.0
    %284 = vmatpush2.msra.mxu0 0.0
    %285 = vmatprep.subr.mxu0 0.0
    %286 = vmatpush2.msra.mxu0 0.0
    %287 = vmatprep.subr.mxu0 0.0
    %288 = vmatpush2.msra.mxu0 0.0
    %289 = vmatprep.subr.mxu0 0.0
    %290 = vmatpush2.msra.mxu0 0.0
    %291 = vmatprep.subr.mxu0 0.0
    %292 = vmatpush2.msra.mxu0 0.0
    %293 = vmatprep.subr.mxu0 0.0
    %294 = vmatpush2.msra.mxu0 0.0
    %295 = vmatprep.mubr.f32.mxu0 0.0
    %296 = vmatmul.mubr.f32.gmra.mxu0 %v207
    %v297 = vpop.f32.mrf.mxu0
    %v298 = vadd.f32 %v229, %v297
    %v299 = vpop.f32.mrf.mxu0
    %300 = vdwg.mxu0
    %vm301 = vcmask 130048
    %302 = vst.msk [vmem:[#allocation2] sm:$0xff] %vm301, %v298
    // Predicated region
    $region30: #{generator_forward.1} parent=1 // pred_check
      _
    $region31: #{generator_forward.1} parent=1 // pred_check_branch
      %304 = sbr.rel (0) target = $region33
    $region32: #{generator_forward.1} parent=1 // pred_region
      %s306 = ssub.s32 128, 128
      %307 = vsyncadd [#allocation3], %s306
      %s309 = sshll.u32 [#allocation2], 4
      %s310 = int_to_ptr.vmem [resolvable:$true] %s309
      %312 = dma.vmem_to_hbm [thread:$0]  %s310, 128, %s7, [#allocation3]
    $region33: #{generator_forward.1} parent=1 // pred_fallthru
      _
    // Predicated region
    $region34: #{generator_forward.1} parent=1 // pred_check
      _
    $region35: #{generator_forward.1} parent=1 // pred_check_branch
      %314 = sbr.rel (0) target = $region37
    $region36: #{generator_forward.1} parent=1 // pred_region
      %315 = dma.done [#allocation3], 128
    $region37: #{generator_forward.1} parent=1 // pred_fallthru
      _
    %316 = vsyncpa [#allocation3], 1

</llo_original>
